<compile_context>
chip_gen: v6e
topology: v6e:2x2x1
jax: 0.10.0
libtpu: 0.0.40
codegen_flags: <defaults>
</compile_context>

<pallas_src>
import jax
import jax.numpy as jnp
from jax import lax
from jax.experimental import pallas as pl
from jax.experimental.pallas import tpu as pltpu


def _linear_kernel(x_ref, w_ref, b_ref, o_ref):
    # x_ref: (tm, K)  token strip, full contraction dim resident in VMEM
    # w_ref: (tn, K)  weight strip, PyTorch (out_features, in_features) layout
    # b_ref: (1, tn)  bias strip (f32)
    # o_ref: (tm, tn) output tile
    #
    # x @ W.T : contract the last dim of both operands.  Mosaic lowers this to
    # the MXU's native transposed-weight load (cf. pl.dot(trans_b=True)), so no
    # per-tile XLU transpose and no W.T materialization in HBM.
    acc = lax.dot_general(
        x_ref[...], w_ref[...],
        dimension_numbers=(((1,), (1,)), ((), ())),
        preferred_element_type=jnp.float32)
    o_ref[...] = (acc + b_ref[...]).astype(o_ref.dtype)


def _sublane_pack(dtype):
    # f32 -> 8, bf16 -> 16, int8/fp8 -> 32 rows per vreg sublane group.
    return max(8, 32 // jnp.dtype(dtype).itemsize)


def _largest_divisor_tile(n, want, align):
    """Largest t <= want with n % t == 0, preferring lane-aligned multiples."""
    want = min(want, n)
    t = (want // align) * align
    while t >= align:
        if n % t == 0:
            return t
        t -= align
    for t in range(min(want, n), 0, -1):
        if n % t == 0:
            return t
    return n


def _vmem_cap_bytes():
    try:
        phys = pltpu.get_tpu_info().vmem_capacity_bytes
    except Exception:
        phys = 64 * 1024 * 1024  # conservative (v7x)
    return int(phys * 0.75)      # ~48 MiB on v7x, ~96 MiB on v5e/v6e


def _choose_tiles(T, N, K, x_dtype, w_dtype, out_dtype, tm_req, tn_req):
    pack = _sublane_pack(x_dtype)

    # Output strip: lane-aligned divisor of N (no hard assert on N % tn).
    tn = _largest_divisor_tile(N, tn_req, 128)

    # Token tile: clamp to the token count, round to the dtype's sublane pack.
    tm = min(tm_req, T)
    tm = max(pack, ((tm + pack - 1) // pack) * pack)

    cap = _vmem_cap_bytes()
    xb = jnp.dtype(x_dtype).itemsize
    wb = jnp.dtype(w_dtype).itemsize
    ob = jnp.dtype(out_dtype).itemsize

    def vmem_est(tm_, tn_):
        # Double-buffered x / w / bias / out strips.
        return 2 * (tm_ * K * xb + tn_ * K * wb + tn_ * 4 + tm_ * tn_ * ob)

    while vmem_est(tm, tn) > cap and tm > pack:
        tm = max(pack, (tm // 2 // pack) * pack)

    Tp = pl.cdiv(T, tm) * tm

    # v7x megacore: both grid axes are "parallel"; ensure >= 2 total grid steps
    # so the second TensorCore gets work (harmless on single-TC v5e/v6e).
    if (Tp // tm) * (N // tn) < 2 and tm > pack:
        tm = max(pack, -(-(tm // 2) // pack) * pack)
        Tp = pl.cdiv(T, tm) * tm

    return tm, tn, Tp, cap


def pallas_linear(x2d, w, b2, *, tm, tn, vmem_limit, out_dtype=None):
    """y = x2d @ w.T + b.

    x2d: (Tp, K) with Tp % tm == 0 (padding is hoisted to the caller so the
         whole layer chain pays it once, not per layer).
    w:   (N, K)  PyTorch (out_features, in_features) layout -- never transposed.
    b2:  (1, N)  f32 bias.
    """
    Tp, K = x2d.shape
    N = w.shape[0]
    assert Tp % tm == 0 and N % tn == 0
    out_dtype = out_dtype or x2d.dtype

    nt_tok, nt_out = Tp // tm, N // tn

    # Grid ordering: the operand whose index_map depends only on the OUTER axis
    # stays VMEM-resident across all inner steps (Pallas skips the re-DMA when
    # the block index is unchanged).  Pick the ordering with less HBM traffic.
    xb = jnp.dtype(x2d.dtype).itemsize
    wb = jnp.dtype(w.dtype).itemsize
    bytes_w_stationary = N * K * wb + nt_out * Tp * K * xb   # weights read once
    bytes_x_stationary = Tp * K * xb + nt_tok * N * K * wb   # activations once
    weight_stationary = bytes_w_stationary <= bytes_x_stationary

    if weight_stationary:
        grid = (nt_out, nt_tok)
        x_spec = pl.BlockSpec((tm, K), lambda j, i: (i, 0))
        w_spec = pl.BlockSpec((tn, K), lambda j, i: (j, 0))
        b_spec = pl.BlockSpec((1, tn), lambda j, i: (0, j))
        o_spec = pl.BlockSpec((tm, tn), lambda j, i: (i, j))
    else:
        grid = (nt_tok, nt_out)
        x_spec = pl.BlockSpec((tm, K), lambda i, j: (i, 0))
        w_spec = pl.BlockSpec((tn, K), lambda i, j: (j, 0))
        b_spec = pl.BlockSpec((1, tn), lambda i, j: (0, j))
        o_spec = pl.BlockSpec((tm, tn), lambda i, j: (i, j))

    return pl.pallas_call(
        _linear_kernel,
        out_shape=jax.ShapeDtypeStruct((Tp, N), out_dtype),
        grid_spec=pltpu.PrefetchScalarGridSpec(
            num_scalar_prefetch=0,
            grid=grid,
            in_specs=[x_spec, w_spec, b_spec],
            out_specs=o_spec,
        ),
        compiler_params=pltpu.CompilerParams(
            dimension_semantics=("parallel", "parallel"),
            vmem_limit_bytes=vmem_limit),
    )(x2d, w, b2)


def linear_model_forward(x, params, *, tm=512, tn=512, compute_dtype=None):
    """LinearModel.forward: sequential bias-ful nn.Linear(dim, dim) layers.

    params: list of (W, b) with W in PyTorch (out_features, in_features) layout.
    """
    orig_dtype = x.dtype
    lead = x.shape[:-1]
    h = x.reshape(-1, x.shape[-1])
    T, K = h.shape

    # Cast weights/activations to the compute dtype ONCE, before the layer loop
    # (not inside pallas_linear per call).  Bias stays f32: it is added in the
    # kernel's f32 epilogue.
    if compute_dtype is not None:
        h = h.astype(compute_dtype)
        params = [(w.astype(compute_dtype), b) for (w, b) in params]
    prepped = [(w, b.reshape(1, -1).astype(jnp.float32)) for (w, b) in params]

    N = prepped[0][0].shape[0]
    assert all(w.shape == (N, K) for (w, _) in prepped), \
        "LinearModel layers are all dim -> dim"

    tm, tn, Tp, vmem_limit = _choose_tiles(
        T, N, K, h.dtype, prepped[0][0].dtype, h.dtype, tm, tn)

    # Pad tokens to a tile multiple ONCE for the whole chain; slice once at the
    # end.  Padded rows only ever see bias values and are discarded by the
    # final slice -- never reduced over inside the chain.
    if Tp != T:
        h = jnp.pad(h, ((0, Tp - T), (0, 0)))

    # TODO(synk): for small T (decode-like shapes), fuse the whole layer chain
    # into a single pallas_call keeping the (Tp, dim) activations VMEM-resident
    # and streaming each layer's weight strips, removing the per-layer
    # activation HBM round-trip.
    for (w, b2) in prepped:
        h = pallas_linear(h, w, b2, tm=tm, tn=tn, vmem_limit=vmem_limit)

    if Tp != T:
        h = h[:T]
    # Match the reference module's output dtype (PyTorch LinearModel is f32).
    return h.reshape(*lead, h.shape[-1]).astype(orig_dtype)


def _ref_forward(x, params):
    h = x
    for (w, b) in params:
        h = h @ w.T + b
    return h


if __name__ == "__main__":
    # Small-shape analog of LinearModel(num_layers=2) with Linear(dim, dim).
    # tokens = 2*40 = 80 deliberately not a multiple of the token tile to
    # exercise the (hoisted) padding path; dim=256 keeps strips lane-dense.
    batch, seq, dim, num_layers = 2, 40, 256, 2

    key = jax.random.PRNGKey(0)
    keys = jax.random.split(key, 1 + 2 * num_layers)
    x = jax.random.normal(keys[0], (batch, seq, dim), dtype=jnp.float32)

    params = []
    for li in range(num_layers):
        w = 0.02 * jax.random.normal(keys[1 + 2 * li], (dim, dim),
                                     dtype=jnp.float32)   # (out, in) layout
        b = 0.01 * jax.random.normal(keys[2 + 2 * li], (dim,),
                                     dtype=jnp.float32)
        params.append((w, b))

    # f32 path: tm=48 -> T=80 pads to Tp=96 (2 token tiles), tn=128 -> 2 output
    # strips, so the grid is 2x2 and both v7x TensorCores get work.
    y = linear_model_forward(x, params, tm=48, tn=128)
    jax.block_until_ready(y)

    y_ref = _ref_forward(x, params)
    assert y.shape == x.shape and y.dtype == x.dtype
    assert jnp.allclose(y, y_ref, atol=1e-4, rtol=1e-4), "f32 mismatch vs reference"

    # bf16-operand path (cast once before the chain, f32 MXU accumulation,
    # output cast back to f32).  Default tiles exercise the auto tm clamp,
    # bf16 sublane rounding and the >=2-grid-steps adjustment.
    y_bf16 = linear_model_forward(x, params, compute_dtype=jnp.bfloat16)
    jax.block_until_ready(y_bf16)
    assert y_bf16.dtype == x.dtype
    assert jnp.allclose(y_bf16, y_ref, atol=3e-2, rtol=3e-2), "bf16 mismatch vs reference"

    print("KERNEL_OK")
</pallas_src>

<mosaic_0001>
module attributes {stable_mosaic.version = 11 : i64} {
  func.func @_linear_kernel(%arg0: i32, %arg1: i32, %arg2: memref<48x256xf32, #tpu.memory_space<vmem>>, %arg3: memref<128x256xf32, #tpu.memory_space<vmem>>, %arg4: memref<1x128xf32, #tpu.memory_space<vmem>>, %arg5: memref<48x128xf32, #tpu.memory_space<vmem>>) attributes {dimension_semantics = [#tpu.dimension_semantics<parallel>, #tpu.dimension_semantics<parallel>], iteration_bounds = array<i64: 2, 2>, scalar_prefetch = 0 : i64, scratch_operands = 0 : i64, tpu.core_type = #tpu.core_type<tc>, window_params = [{transform_indices = @transform_0, window_bounds = array<i64: 48, 256>}, {transform_indices = @transform_1, window_bounds = array<i64: 128, 256>}, {transform_indices = @transform_2, window_bounds = array<i64: 1, 128>}, {transform_indices = @transform_3, window_bounds = array<i64: 48, 128>}]} {
    %c0 = arith.constant 0 : index
    %c0_0 = arith.constant 0 : index
    %0 = vector.load %arg2[%c0, %c0_0] : memref<48x256xf32, #tpu.memory_space<vmem>>, vector<48x256xf32>
    %c0_1 = arith.constant 0 : index
    %c0_2 = arith.constant 0 : index
    %1 = vector.load %arg3[%c0_1, %c0_2] : memref<128x256xf32, #tpu.memory_space<vmem>>, vector<128x256xf32>
    %cst = arith.constant dense<0.000000e+00> : vector<48x128xf32>
    %2 = tpu.matmul %0, %1, %cst {dimension_numbers = #tpu.dot_dimension_numbers<[1], [1], [0], [0], [0, 0, 1, 0], [], []>} : vector<48x256xf32>, vector<128x256xf32>, vector<48x128xf32> -> vector<48x128xf32>
    %c0_3 = arith.constant 0 : index
    %c0_4 = arith.constant 0 : index
    %3 = vector.load %arg4[%c0_3, %c0_4] : memref<1x128xf32, #tpu.memory_space<vmem>>, vector<1x128xf32>
    %4 = vector.broadcast %3 : vector<1x128xf32> to vector<48x128xf32>
    %5 = arith.addf %2, %4 : vector<48x128xf32>
    %c0_5 = arith.constant 0 : index
    %c0_6 = arith.constant 0 : index
    %6 = vector.load %arg5[%c0_5, %c0_6] : memref<48x128xf32, #tpu.memory_space<vmem>>, vector<48x128xf32>
    tpu.vector_store %arg5[%c0_5, %c0_6], %5 {strides = array<i32>} : memref<48x128xf32, #tpu.memory_space<vmem>>, vector<48x128xf32>,
    return
  }
  func.func @transform_0(%arg0: i32, %arg1: i32) -> (i32, i32) {
    %c0_i32 = arith.constant 0 : i32
    %c0_i32_0 = arith.constant 0 : i32
    return %arg1, %c0_i32 : i32, i32
  }
  func.func @transform_1(%arg0: i32, %arg1: i32) -> (i32, i32) {
    %c0_i32 = arith.constant 0 : i32
    %c0_i32_0 = arith.constant 0 : i32
    return %arg0, %c0_i32 : i32, i32
  }
  func.func @transform_2(%arg0: i32, %arg1: i32) -> (i32, i32) {
    %c0_i32 = arith.constant 0 : i32
    %c0_i32_0 = arith.constant 0 : i32
    return %c0_i32, %arg0 : i32, i32
  }
  func.func @transform_3(%arg0: i32, %arg1: i32) -> (i32, i32) {
    %c0_i32 = arith.constant 0 : i32
    return %arg1, %arg0 : i32, i32
  }
}

</mosaic_0001>

<llo_original>
// kernel: tpu_custom_call.1
$region0: #{tpu_custom_call.1}
  #allocation0 [shape = 'u32[]', space=smem, size = 0x4, offset = 0x4, fixed_abs, tag = 'smem constant byte address 0x4 - core index']
  #allocation1 [shape = 'u32[144,128]{1,0:T(1,128)}', space=vmem, size = 0x12000, scoped, tag = 'internal scratch']
  %s0 = inlined_call_operand.hbm [shape: f32[96,256], index: 0, kind: input, shape index: {}]
  %s1 = inlined_call_operand.hbm [shape: f32[256,256], index: 1, kind: input, shape index: {}]
  %s2 = inlined_call_operand.vmem [shape: f32[1,256], index: 2, kind: input, shape index: {}]
  %s3 = inlined_call_operand.hbm [shape: f32[96,256], index: 3, kind: output, shape index: {}]
  %s4 = sld [smem:[#allocation0]]
  $region53: #{tpu_custom_call.1} parent=0
    _
  %s6 = ssub.s32 1, %s4
  %s7 = scalar_select 0, %s6, %s4
  $region1: #{tpu_custom_call.1} parent=0
    #allocation2 [shape = 'u8[98304]{0}', space=vmem, size = 0x18000, scoped, tag = 'input window, operand 0']
    #allocation3 [shape = 's32[2]{0}', space=sflag, size = 0x8, scoped, tag = 'scoped memory for tpu_custom_call.1']
    #allocation4 [shape = 's32[2]{0}', space=sflag, size = 0x8, scoped, tag = 'scoped memory for tpu_custom_call.1']
    #allocation5 [shape = 'u8[262144]{0}', space=vmem, size = 0x40000, scoped, tag = 'input window, operand 1']
    #allocation6 [shape = 's32[2]{0}', space=sflag, size = 0x8, scoped, tag = 'scoped memory for tpu_custom_call.1']
    #allocation7 [shape = 'u8[49152]{0}', space=vmem, size = 0xc000, scoped, tag = 'output window, operand 0']
    %8 = vsyncpa [#allocation3], 0
    %s9 = scalar_lea.sflag [#allocation3], 1
    %10 = vsyncpa %s9, 0
    %11 = vsyncpa [#allocation6], 0
    %s12 = scalar_lea.sflag [#allocation6], 1
    %13 = vsyncpa %s12, 0
    %14 = vsyncpa [#allocation4], 0
    %s15 = scalar_lea.sflag [#allocation4], 1
    %16 = vsyncpa %s15, 0
    loop: start=0, step=1, limit=6
    $region2: #{tpu_custom_call.1} parent=1 // loop_pre_header
      _
    $region3: #{tpu_custom_call.1} parent=1 // loop_header
      %s18 = sphi 0, %s22
      %p19 = scmp.ge.s32.totalorder %s18, 6
      %s25 = sphi 0, %s37
      %s26 = sphi 0, %s33
      %s27 = sphi 0, %s25
      %s28 = sphi 0, %s26
      %s29 = sphi 0, %s27
      %s30 = sphi 0, %s28
      %s40 = sphi 0, %s42
      %s43 = sphi 0, %s40
      %s44 = sphi 0, %s43
      %s60 = sphi 0, %s44
      %s66 = sphi 0, %s68
      %s69 = sphi 0, %s66
      %s70 = sphi 0, %s69
      %s86 = sphi 0, %s70
      %s92 = sphi 0, %s94
      %s95 = sphi 0, %s92
      %s96 = sphi 0, %s95
      %s112 = sphi 0, %s96
      %s120 = sphi 0, %s122
      %s123 = sphi 0, %s120
      %s124 = sphi 0, %s123
      %s140 = sphi 0, %s124
    $region4: #{tpu_custom_call.1} parent=1 // loop_header_branch
      %21 = sbr.rel (%p19) target = $region8
    $region5: #{tpu_custom_call.1} parent=1 // loop_body
      %s23 = ssub.s32 %s18, 1
      %s24 = ssub.s32 %s18, 2
      %s31 = sadd.s32 1, %s26
      %p32 = scmp.ge.s32.totalorder %s31, 2
      %s33 = scalar_select %p32, 0, %s31
      %s34 = sadd.s32 1, %s25
      %s35 = scalar_select %p32, %s34, %s25
      %p36 = scmp.ge.s32.totalorder %s35, 2
      %s37 = scalar_select %p36, 0, %s35
      %s38 = ssub.s32 %s26, %s33
      %p39 = scmp.eq.s32.totalorder %s38, 0
      %s41 = sadd.s32 %s40, 1
      %s42 = scalar_select %p39, %s40, %s41
      %p45 = pneg %p39
      %p46 = scmp.eq.s32.totalorder %s18, 3
      %p47 = por %p45, %p46
      %p48 = scmp.ne.s32.totalorder %s40, %s43
      %p49 = scmp.eq.s32.totalorder %s18, 0
      %p50 = por %p48, %p49
      %p51 = scmp.ne.s32.totalorder %s40, %s43
      %p52 = scmp.eq.s32.totalorder %s23, 3
      %p53 = por %p51, %p52
      %p54 = scmp.ne.s32.totalorder %s43, %s44
      %p55 = scmp.eq.s32.totalorder %s23, 0
      %p56 = por %p54, %p55
      %p57 = scmp.ne.s32.totalorder %s43, %s44
      %p58 = scmp.eq.s32.totalorder %s24, 3
      %p59 = por %p57, %p58
      %p61 = scmp.ne.s32.totalorder %s44, %s60
      %p62 = scmp.eq.s32.totalorder %s24, 0
      %p63 = por %p61, %p62
      %s64 = ssub.s32 %s25, %s37
      %p65 = scmp.eq.s32.totalorder %s64, 0
      %s67 = sadd.s32 %s66, 1
      %s68 = scalar_select %p65, %s66, %s67
      %p71 = pneg %p65
      %p72 = scmp.eq.s32.totalorder %s18, 3
      %p73 = por %p71, %p72
      %p74 = scmp.ne.s32.totalorder %s66, %s69
      %p75 = scmp.eq.s32.totalorder %s18, 0
      %p76 = por %p74, %p75
      %p77 = scmp.ne.s32.totalorder %s66, %s69
      %p78 = scmp.eq.s32.totalorder %s23, 3
      %p79 = por %p77, %p78
      %p80 = scmp.ne.s32.totalorder %s69, %s70
      %p81 = scmp.eq.s32.totalorder %s23, 0
      %p82 = por %p80, %p81
      %p83 = scmp.ne.s32.totalorder %s69, %s70
      %p84 = scmp.eq.s32.totalorder %s24, 3
      %p85 = por %p83, %p84
      %p87 = scmp.ne.s32.totalorder %s70, %s86
      %p88 = scmp.eq.s32.totalorder %s24, 0
      %p89 = por %p87, %p88
      %s90 = ssub.s32 %s25, %s37
      %p91 = scmp.eq.s32.totalorder %s90, 0
      %s93 = sadd.s32 %s92, 1
      %s94 = scalar_select %p91, %s92, %s93
      %p97 = pneg %p91
      %p98 = scmp.eq.s32.totalorder %s18, 3
      %p99 = por %p97, %p98
      %p100 = scmp.ne.s32.totalorder %s92, %s95
      %p101 = scmp.eq.s32.totalorder %s18, 0
      %p102 = por %p100, %p101
      %p103 = scmp.ne.s32.totalorder %s92, %s95
      %p104 = scmp.eq.s32.totalorder %s23, 3
      %p105 = por %p103, %p104
      %p106 = scmp.ne.s32.totalorder %s95, %s96
      %p107 = scmp.eq.s32.totalorder %s23, 0
      %p108 = por %p106, %p107
      %p109 = scmp.ne.s32.totalorder %s95, %s96
      %p110 = scmp.eq.s32.totalorder %s24, 3
      %p111 = por %p109, %p110
      %p113 = scmp.ne.s32.totalorder %s96, %s112
      %p114 = scmp.eq.s32.totalorder %s24, 0
      %p115 = por %p113, %p114
      %s116 = ssub.s32 %s26, %s33
      %s117 = ssub.s32 %s25, %s37
      %s118 = sor.u32 %s116, %s117
      %p119 = scmp.eq.s32.totalorder %s118, 0
      %s121 = sadd.s32 %s120, 1
      %s122 = scalar_select %p119, %s120, %s121
      %p125 = pneg %p119
      %p126 = scmp.eq.s32.totalorder %s18, 3
      %p127 = por %p125, %p126
      %p128 = scmp.ne.s32.totalorder %s120, %s123
      %p129 = scmp.eq.s32.totalorder %s18, 0
      %p130 = por %p128, %p129
      %p131 = scmp.ne.s32.totalorder %s120, %s123
      %p132 = scmp.eq.s32.totalorder %s23, 3
      %p133 = por %p131, %p132
      %p134 = scmp.ne.s32.totalorder %s123, %s124
      %p135 = scmp.eq.s32.totalorder %s23, 0
      %p136 = por %p134, %p135
      %p137 = scmp.ne.s32.totalorder %s123, %s124
      %p138 = scmp.eq.s32.totalorder %s24, 3
      %p139 = por %p137, %p138
      %p141 = scmp.ne.s32.totalorder %s124, %s140
      %p142 = scmp.eq.s32.totalorder %s24, 0
      %p143 = por %p141, %p142
      %p144 = scmp.le.s32.totalorder 1, %s18
      %p145 = scmp.lt.s32.totalorder %s18, 5
      %p146 = pnand %p144, %p145
      %p147 = pneg %p146
      // Predicated region
      $region9: #{tpu_custom_call.1} parent=5 // pred_check
        _
      $region10: #{tpu_custom_call.1} parent=5 // pred_check_branch
        %149 = sbr.rel (%p146) target = $region12
      $region11: #{tpu_custom_call.1} parent=5 // pred_region
        %s150 = ssub.s32 %s18, 1
      $region12: #{tpu_custom_call.1} parent=5 // pred_fallthru
        _
      %p151 = scmp.lt.s32.totalorder %s18, 4
      // Predicated region
      $region13: #{tpu_custom_call.1} parent=5 // pred_check
        %p152 = pneg %p151
      $region14: #{tpu_custom_call.1} parent=5 // pred_check_branch
        %154 = sbr.rel (%p152) target = $region16
      $region15: #{tpu_custom_call.1} parent=5 // pred_region
        // Predicated region
        $region17: #{tpu_custom_call.1} parent=15 // pred_check
          %p155 = pneg %p50
        $region18: #{tpu_custom_call.1} parent=15 // pred_check_branch
          %157 = sbr.rel (%p155) target = $region20
        $region19: #{tpu_custom_call.1} parent=15 // pred_region
          %s158 = sand.u32 %s40, 1
          %s159 = scalar_lea.sflag [#allocation3], %s158
          %s160 = sand.u32 %s40, 1
          %s161 = smul.addr %s160, 96
          %s162 = scalar_lea.vmem [#allocation2], %s161
          %s163 = smul.u32 6, %s26
          %s165 = ssub.s32 1536, 1536
          %166 = vsyncadd %s159, %s165
          %s167 = smul.addr %s163, 2
          %s168 = smul.addr %s167, 128
          %s169 = scalar_lea.hbm %s0, %s168
          %s170 = sshll.u32 %s162, 4
          %s171 = int_to_ptr.vmem [resolvable:$true] %s170
          %176 = dma.hbm_to_vmem [thread:$0]  %s169, 1536, %s171, %s159, 256, 256, 16
        $region20: #{tpu_custom_call.1} parent=15 // pred_fallthru
          _
        // Predicated region
        $region21: #{tpu_custom_call.1} parent=15 // pred_check
          %p177 = pneg %p76
        $region22: #{tpu_custom_call.1} parent=15 // pred_check_branch
          %179 = sbr.rel (%p177) target = $region24
        $region23: #{tpu_custom_call.1} parent=15 // pred_region
          %s180 = sand.u32 %s66, 1
          %s181 = scalar_lea.sflag [#allocation6], %s180
          %s182 = sand.u32 %s66, 1
          %s183 = smul.addr %s182, 256
          %s184 = scalar_lea.vmem [#allocation5], %s183
          %s185 = smul.u32 16, %s25
          %s187 = ssub.s32 4096, 4096
          %188 = vsyncadd %s181, %s187
          %s189 = smul.addr %s185, 2
          %s190 = smul.addr %s189, 128
          %s191 = scalar_lea.hbm %s1, %s190
          %s192 = sshll.u32 %s184, 4
          %s193 = int_to_ptr.vmem [resolvable:$true] %s192
          %198 = dma.hbm_to_vmem [thread:$0]  %s191, 4096, %s193, %s181, 256, 256, 16
        $region24: #{tpu_custom_call.1} parent=15 // pred_fallthru
          _
        // Predicated region
        $region25: #{tpu_custom_call.1} parent=15 // pred_check
          %p199 = pneg %p102
        $region26: #{tpu_custom_call.1} parent=15 // pred_check_branch
          %201 = sbr.rel (%p199) target = $region28
        $region27: #{tpu_custom_call.1} parent=15 // pred_region
          %p202 = scmp.lt.s32.totalorder %s25, 1
          %s203 = scalar_select %p202, %s25, 1
          %s204 = scalar_lea.vmem %s2, %s203
        $region28: #{tpu_custom_call.1} parent=15 // pred_fallthru
          _
      $region16: #{tpu_custom_call.1} parent=5 // pred_fallthru
        _
      %p205 = scmp.le.s32.totalorder 1, %s18
      %p206 = scmp.lt.s32.totalorder %s18, 5
      %p207 = pnand %p205, %p206
      %p208 = pneg %p207
      // Predicated region
      $region29: #{tpu_custom_call.1} parent=5 // pred_check
        _
      $region30: #{tpu_custom_call.1} parent=5 // pred_check_branch
        %210 = sbr.rel (%p207) target = $region32
      $region31: #{tpu_custom_call.1} parent=5 // pred_region
        %s211 = ssub.s32 %s18, 1
        %s212 = sand.u32 %s43, 1
        %s213 = scalar_lea.sflag [#allocation3], %s212
        %s214 = sand.u32 %s43, 1
        %s215 = smul.addr %s214, 96
        %s216 = scalar_lea.vmem [#allocation2], %s215
        // Predicated region
        $region33: #{tpu_custom_call.1} parent=31 // pred_check
          %p217 = pneg %p56
        $region34: #{tpu_custom_call.1} parent=31 // pred_check_branch
          %219 = sbr.rel (%p217) target = $region36
        $region35: #{tpu_custom_call.1} parent=31 // pred_region
          %220 = dma.done %s213, 1536
        $region36: #{tpu_custom_call.1} parent=31 // pred_fallthru
          _
        %s221 = sand.u32 %s69, 1
        %s222 = scalar_lea.sflag [#allocation6], %s221
        %s223 = sand.u32 %s69, 1
        %s224 = smul.addr %s223, 256
        %s225 = scalar_lea.vmem [#allocation5], %s224
        // Predicated region
        $region37: #{tpu_custom_call.1} parent=31 // pred_check
          %p226 = pneg %p82
        $region38: #{tpu_custom_call.1} parent=31 // pred_check_branch
          %228 = sbr.rel (%p226) target = $region40
        $region39: #{tpu_custom_call.1} parent=31 // pred_region
          %229 = dma.done %s222, 4096
        $region40: #{tpu_custom_call.1} parent=31 // pred_fallthru
          _
        %s230 = sand.u32 %s43, 1
        %s231 = scalar_lea.sflag [#allocation3], %s230
        %s232 = sand.u32 %s43, 1
        %s233 = smul.addr %s232, 96
        %s234 = scalar_lea.vmem [#allocation2], %s233
        %p235 = pneg %p56
        %p236 = pneg %p53
        %s237 = sand.u32 %s69, 1
        %s238 = scalar_lea.sflag [#allocation6], %s237
        %s239 = sand.u32 %s69, 1
        %s240 = smul.addr %s239, 256
        %s241 = scalar_lea.vmem [#allocation5], %s240
        %p242 = pneg %p82
        %p243 = pneg %p79
        %p244 = scmp.lt.s32.totalorder %s27, 1
        %s245 = scalar_select %p244, %s27, 1
        %s246 = scalar_lea.vmem %s2, %s245
        %p247 = pneg %p108
        %p248 = pneg %p105
        %p249 = pneg %p136
        %p250 = pneg %p133
        %s251 = sand.u32 %s123, 1
        %s252 = scalar_lea.sflag [#allocation4], %s251
        %s253 = sand.u32 %s123, 1
        %s254 = smul.addr %s253, 48
        %s255 = scalar_lea.vmem [#allocation7], %s254
        %s256 = smul.u32 6, %s28
        %s257 = smul.u32 16, %s27
        %p258 = scmp.lt.s32.totalorder %s27, 1
        %s259 = scalar_select %p258, %s27, 1
        %s260 = scalar_lea.vmem %s2, %s259
        %s261 = smul.u32 6, %s28
        %v262 = vld [vmem:[%s216] sm:$0xff]
        %v263 = vld [vmem:[%s216 + $0x8] sm:$0xff]
        %v264 = vld [vmem:[%s216 + $0x10] sm:$0xff]
        %v265 = vld [vmem:[%s216 + $0x18] sm:$0xff]
        %v266 = vld [vmem:[%s216 + $0x20] sm:$0xff]
        %v267 = vld [vmem:[%s216 + $0x28] sm:$0xff]
        %v268 = vld [vmem:[%s216 + $0x30] sm:$0xff]
        %v269 = vld [vmem:[%s216 + $0x38] sm:$0xff]
        %v270 = vld [vmem:[%s216 + $0x40] sm:$0xff]
        %v271 = vld [vmem:[%s216 + $0x48] sm:$0xff]
        %v272 = vld [vmem:[%s216 + $0x50] sm:$0xff]
        %v273 = vld [vmem:[%s216 + $0x58] sm:$0xff]
        %v274 = vld [vmem:[%s225] sm:$0xff]
        %v275 = vld [vmem:[%s225 + $0x8] sm:$0xff]
        %v276 = vld [vmem:[%s225 + $0x10] sm:$0xff]
        %v277 = vld [vmem:[%s225 + $0x18] sm:$0xff]
        %v278 = vld [vmem:[%s225 + $0x20] sm:$0xff]
        %v279 = vld [vmem:[%s225 + $0x28] sm:$0xff]
        %v280 = vld [vmem:[%s225 + $0x30] sm:$0xff]
        %v281 = vld [vmem:[%s225 + $0x38] sm:$0xff]
        %v282 = vld [vmem:[%s225 + $0x40] sm:$0xff]
        %v283 = vld [vmem:[%s225 + $0x48] sm:$0xff]
        %v284 = vld [vmem:[%s225 + $0x50] sm:$0xff]
        %v285 = vld [vmem:[%s225 + $0x58] sm:$0xff]
        %v286 = vld [vmem:[%s225 + $0x60] sm:$0xff]
        %v287 = vld [vmem:[%s225 + $0x68] sm:$0xff]
        %v288 = vld [vmem:[%s225 + $0x70] sm:$0xff]
        %v289 = vld [vmem:[%s225 + $0x78] sm:$0xff]
        %v290 = vld [vmem:[%s225 + $0x80] sm:$0xff]
        %v291 = vld [vmem:[%s225 + $0x88] sm:$0xff]
        %v292 = vld [vmem:[%s225 + $0x90] sm:$0xff]
        %v293 = vld [vmem:[%s225 + $0x98] sm:$0xff]
        %v294 = vld [vmem:[%s225 + $0xa0] sm:$0xff]
        %v295 = vld [vmem:[%s225 + $0xa8] sm:$0xff]
        %v296 = vld [vmem:[%s225 + $0xb0] sm:$0xff]
        %v297 = vld [vmem:[%s225 + $0xb8] sm:$0xff]
        %v298 = vld [vmem:[%s225 + $0xc0] sm:$0xff]
        %v299 = vld [vmem:[%s225 + $0xc8] sm:$0xff]
        %v300 = vld [vmem:[%s225 + $0xd0] sm:$0xff]
        %v301 = vld [vmem:[%s225 + $0xd8] sm:$0xff]
        %v302 = vld [vmem:[%s225 + $0xe0] sm:$0xff]
        %v303 = vld [vmem:[%s225 + $0xe8] sm:$0xff]
        %v304 = vld [vmem:[%s225 + $0xf0] sm:$0xff]
        %v305 = vld [vmem:[%s225 + $0xf8] sm:$0xff]
        %v306 = vld [vmem:[%s260] sm:$0x1]
        %v308 = vlaneseq
        %v309 = vshrl.u32 %v308, 7
        %v310 = vsub.s32 0, %v309
        %v311 = vrot.slane %v306, %v310
        %313 = vmatprep.subr.mxu0 %v305
        %314 = vmatpush1.xpose.msra.mxu0 %v304
        %315 = vmatprep.subr.mxu0 %v303
        %316 = vmatpush1.xpose.msra.mxu0 %v302
        %317 = vmatprep.subr.mxu0 %v301
        %318 = vmatpush1.xpose.msra.mxu0 %v300
        %319 = vmatprep.subr.mxu0 %v299
        %320 = vmatpush1.xpose.msra.mxu0 %v298
        %321 = vmatprep.subr.mxu0 %v297
        %322 = vmatpush1.xpose.msra.mxu0 %v296
        %323 = vmatprep.subr.mxu0 %v295
        %324 = vmatpush1.xpose.msra.mxu0 %v294
        %325 = vmatprep.subr.mxu0 %v293
        %326 = vmatpush1.xpose.msra.mxu0 %v292
        %327 = vmatprep.subr.mxu0 %v291
        %328 = vmatpush1.xpose.msra.mxu0 %v290
        %329 = vmatprep.subr.mxu0 %v289
        %330 = vmatpush1.xpose.msra.mxu0 %v288
        %331 = vmatprep.subr.mxu0 %v287
        %332 = vmatpush1.xpose.msra.mxu0 %v286
        %333 = vmatprep.subr.mxu0 %v285
        %334 = vmatpush1.xpose.msra.mxu0 %v284
        %335 = vmatprep.subr.mxu0 %v283
        %336 = vmatpush1.xpose.msra.mxu0 %v282
        %337 = vmatprep.subr.mxu0 %v281
        %338 = vmatpush1.xpose.msra.mxu0 %v280
        %339 = vmatprep.subr.mxu0 %v279
        %340 = vmatpush1.xpose.msra.mxu0 %v278
        %341 = vmatprep.subr.mxu0 %v277
        %342 = vmatpush1.xpose.msra.mxu0 %v276
        %343 = vmatprep.subr.mxu0 %v275
        %344 = vmatpush1.xpose.msra.mxu0 %v274
        %345 = vmatprep.subr.mxu0 0.0
        %346 = vmatpush2.xpose.msra.mxu0 0.0
        %347 = vmatprep.subr.mxu0 0.0
        %348 = vmatpush2.xpose.msra.mxu0 0.0
        %349 = vmatprep.subr.mxu0 0.0
        %350 = vmatpush2.xpose.msra.mxu0 0.0
        %351 = vmatprep.subr.mxu0 0.0
        %352 = vmatpush2.xpose.msra.mxu0 0.0
        %353 = vmatprep.subr.mxu0 0.0
        %354 = vmatpush2.xpose.msra.mxu0 0.0
        %355 = vmatprep.subr.mxu0 0.0
        %356 = vmatpush2.xpose.msra.mxu0 0.0
        %357 = vmatprep.subr.mxu0 0.0
        %358 = vmatpush2.xpose.msra.mxu0 0.0
        %359 = vmatprep.subr.mxu0 0.0
        %360 = vmatpush2.xpose.msra.mxu0 0.0
        %361 = vmatprep.subr.mxu0 0.0
        %362 = vmatpush2.xpose.msra.mxu0 0.0
        %363 = vmatprep.subr.mxu0 0.0
        %364 = vmatpush2.xpose.msra.mxu0 0.0
        %365 = vmatprep.subr.mxu0 0.0
        %366 = vmatpush2.xpose.msra.mxu0 0.0
        %367 = vmatprep.subr.mxu0 0.0
        %368 = vmatpush2.xpose.msra.mxu0 0.0
        %369 = vmatprep.subr.mxu0 0.0
        %370 = vmatpush2.xpose.msra.mxu0 0.0
        %371 = vmatprep.subr.mxu0 0.0
        %372 = vmatpush2.xpose.msra.mxu0 0.0
        %373 = vmatprep.subr.mxu0 0.0
        %374 = vmatpush2.xpose.msra.mxu0 0.0
        %375 = vmatprep.subr.mxu0 0.0
        %376 = vmatpush2.xpose.msra.mxu0 0.0
        %377 = vmatprep.mubr.f32.mxu0 %v263
        %378 = vmatmul.mubr.f32.gmra.mxu0 %v262
        %v379 = vpop.f32.mrf.mxu0
        %v380 = vadd.f32 %v311, %v379
        %v381 = vpop.f32.mrf.mxu0
        %382 = vmatprep.mubr.f32.mxu0 %v265
        %383 = vmatmul.mubr.f32.gmra.mxu0 %v264
        %v384 = vpop.f32.mrf.mxu0
        %v385 = vadd.f32 %v311, %v384
        %v386 = vpop.f32.mrf.mxu0
        %387 = vmatprep.mubr.f32.mxu0 %v267
        %388 = vmatmul.mubr.f32.gmra.mxu0 %v266
        %v389 = vpop.f32.mrf.mxu0
        %v390 = vadd.f32 %v311, %v389
        %v391 = vpop.f32.mrf.mxu0
        %392 = vmatprep.mubr.f32.mxu0 %v269
        %393 = vmatmul.mubr.f32.gmra.mxu0 %v268
        %v394 = vpop.f32.mrf.mxu0
        %v395 = vadd.f32 %v311, %v394
        %v396 = vpop.f32.mrf.mxu0
        %397 = vmatprep.mubr.f32.mxu0 %v271
        %398 = vmatmul.mubr.f32.gmra.mxu0 %v270
        %v399 = vpop.f32.mrf.mxu0
        %v400 = vadd.f32 %v311, %v399
        %v401 = vpop.f32.mrf.mxu0
        %402 = vmatprep.mubr.f32.mxu0 %v273
        %403 = vmatmul.mubr.f32.gmra.mxu0 %v272
        %v404 = vpop.f32.mrf.mxu0
        %v405 = vadd.f32 %v311, %v404
        %v406 = vpop.f32.mrf.mxu0
        %407 = vdwg.mxu0
        %408 = vst [vmem:[%s255] sm:$0xff] %v380
        %409 = vst [vmem:[%s255 + $0x8] sm:$0xff] %v385
        %410 = vst [vmem:[%s255 + $0x10] sm:$0xff] %v390
        %411 = vst [vmem:[%s255 + $0x18] sm:$0xff] %v395
        %412 = vst [vmem:[%s255 + $0x20] sm:$0xff] %v400
        %413 = vst [vmem:[%s255 + $0x28] sm:$0xff] %v405
        %s414 = sand.u32 %s123, 1
        %s415 = scalar_lea.sflag [#allocation4], %s414
        %s416 = sand.u32 %s123, 1
        %s417 = smul.addr %s416, 48
        %s418 = scalar_lea.vmem [#allocation7], %s417
        // Predicated region
        $region41: #{tpu_custom_call.1} parent=31 // pred_check
          %p419 = pneg %p133
        $region42: #{tpu_custom_call.1} parent=31 // pred_check_branch
          %421 = sbr.rel (%p419) target = $region44
        $region43: #{tpu_custom_call.1} parent=31 // pred_region
          %s422 = smul.u32 6, %s28
          %s424 = ssub.s32 768, 768
          %425 = vsyncadd %s415, %s424
          %s426 = smul.addr %s422, 2
          %s427 = sadd.s32 %s27, %s426
          %s428 = smul.addr %s427, 128
          %s429 = scalar_lea.hbm %s3, %s428
          %s430 = sshll.u32 %s418, 4
          %s431 = int_to_ptr.vmem [resolvable:$true] %s430
          %436 = dma.vmem_to_hbm [thread:$0]  %s431, 768, %s429, %s415, 128, 256, 8
        $region44: #{tpu_custom_call.1} parent=31 // pred_fallthru
          _
      $region32: #{tpu_custom_call.1} parent=5 // pred_fallthru
        _
      %p437 = scmp.le.s32.totalorder 2, %s18
      // Predicated region
      $region45: #{tpu_custom_call.1} parent=5 // pred_check
        %p438 = pneg %p437
      $region46: #{tpu_custom_call.1} parent=5 // pred_check_branch
        %440 = sbr.rel (%p438) target = $region48
      $region47: #{tpu_custom_call.1} parent=5 // pred_region
        %s441 = ssub.s32 %s18, 2
        // Predicated region
        $region49: #{tpu_custom_call.1} parent=47 // pred_check
          %p442 = pneg %p139
        $region50: #{tpu_custom_call.1} parent=47 // pred_check_branch
          %444 = sbr.rel (%p442) target = $region52
        $region51: #{tpu_custom_call.1} parent=47 // pred_region
          %s445 = sand.u32 %s124, 1
          %s446 = scalar_lea.sflag [#allocation4], %s445
          %s447 = sand.u32 %s124, 1
          %s448 = smul.addr %s447, 48
          %s449 = scalar_lea.vmem [#allocation7], %s448
          %450 = dma.done %s446, 768
        $region52: #{tpu_custom_call.1} parent=47 // pred_fallthru
          _
      $region48: #{tpu_custom_call.1} parent=5 // pred_fallthru
        _
    $region6: #{tpu_custom_call.1} parent=1 // loop_footer
      %s22 = sadd.s32 1, %s18
    $region7: #{tpu_custom_call.1} parent=1 // loop_footer_branch
      %17 = sbr.rel target = $region3
    $region8: #{tpu_custom_call.1} parent=1 // loop_exit
      _
    %451 = vsyncpa [#allocation3], 1
    %s452 = scalar_lea.sflag [#allocation3], 1
    %453 = vsyncpa %s452, 1
    %454 = vsyncpa [#allocation6], 1
    %s455 = scalar_lea.sflag [#allocation6], 1
    %456 = vsyncpa %s455, 1
    %457 = vsyncpa [#allocation4], 1
    %s458 = scalar_lea.sflag [#allocation4], 1
    %459 = vsyncpa %s458, 1

</llo_original>
